<compile_context>
chip_gen: v7x
topology: tpu7x:2x2x1
jax: 0.10.0
libtpu: 0.0.40
codegen_flags: <defaults>
</compile_context>

<pallas_src>
import math

import jax
import jax.numpy as jnp
from jax.experimental import pallas as pl
from jax.experimental.pallas import tpu as pltpu


def _round_up(x, m):
    return ((x + m - 1) // m) * m


def _vmem_limit_bytes():
    cap = 64 * 1024 * 1024  # conservative fallback (v7x per-TC physical VMEM)
    try:
        cap = int(getattr(pltpu.get_tpu_info(), "vmem_capacity_bytes", cap))
    except Exception:
        pass
    return cap - cap // 8  # leave ~12.5% headroom for Mosaic internal scratch


# ---------------------------------------------------------------------------
# Fused kernel: out[i-tile] = relu( sum_k adj[i-tile, k-tile] @ (x[k-tile] @ W) )
# ---------------------------------------------------------------------------
def _gcn_fused_kernel(adj_ref, x_ref, w_ref, out_ref):
    # adj_ref: (tile_m, tile_k) bf16  adjacency row/col tile (streamed operand)
    # x_ref:   (tile_k, F_in)   f32   node-feature k-slab
    # w_ref:   (F_in, F_out)    f32   weight, resident across the whole grid
    # out_ref: (tile_m, F_out)  f32   resident accumulator across the k axis
    k = pl.program_id(1)

    @pl.when(k == 0)
    def _():
        out_ref[...] = jnp.zeros_like(out_ref)

    # Support slab for this k block (recomputed per row tile; the extra MXU
    # work is ~F_in/tile_m of the aggregation matmul -> negligible).
    support = jnp.dot(x_ref[...], w_ref[...], preferred_element_type=jnp.float32)
    out_ref[...] += jnp.dot(
        adj_ref[...],
        support.astype(adj_ref.dtype),
        preferred_element_type=jnp.float32,
    )

    @pl.when(k == pl.num_programs(1) - 1)
    def _():
        out_ref[...] = jnp.maximum(out_ref[...], 0.0)


def graph_convolution(x, adj, weight, *, tile_m=512, tile_k=512,
                      adj_stream_dtype=jnp.bfloat16):
    """GCN layer forward: relu(adj @ (x @ weight)).

    x: [N, F_in] f32, adj: [N, N] f32 (dense stand-in for the sparse adj),
    weight: [F_in, F_out] f32  ->  [N, F_out] f32.
    """
    n, f_in = x.shape
    f_out = weight.shape[1]
    assert adj.shape == (n, n), "adj must be [N, N]"
    assert weight.shape[0] == f_in

    # --- tile / padding plan -------------------------------------------------
    n128 = _round_up(n, 128)
    tile_m = max(128, min(tile_m, n128))
    tile_k = max(128, min(tile_k, n128))
    # Keep >= 2 row tiles when possible so v7x's two TensorCores both get work.
    if n128 // tile_m < 2 and tile_m > 128:
        tile_m = max(128, tile_m // 2)
    n_pad = _round_up(n, math.lcm(tile_m, tile_k))
    f_out_pad = _round_up(f_out, 128)  # lane-dense output stores

    if n_pad != n:
        x = jnp.pad(x, ((0, n_pad - n), (0, 0)))
        adj = jnp.pad(adj, ((0, n_pad - n), (0, n_pad - n)))
    if f_out_pad != f_out:
        weight = jnp.pad(weight, ((0, 0), (0, f_out_pad - f_out)))

    # Stream the dominant operand at reduced precision; accumulation stays f32.
    adj_s = adj.astype(adj_stream_dtype)

    grid = (n_pad // tile_m, n_pad // tile_k)
    out = pl.pallas_call(
        _gcn_fused_kernel,
        out_shape=jax.ShapeDtypeStruct((n_pad, f_out_pad), jnp.float32),
        grid_spec=pltpu.PrefetchScalarGridSpec(
            num_scalar_prefetch=0,
            grid=grid,
            in_specs=[
                # adj row/col tile: the only large streamed operand
                pl.BlockSpec((tile_m, tile_k), lambda i, k: (i, k)),
                # matching k-slab of the node features
                pl.BlockSpec((tile_k, f_in), lambda i, k: (k, 0)),
                # weight: small, constant index_map -> fetched once, resident
                pl.BlockSpec((f_in, f_out_pad), lambda i, k: (0, 0)),
            ],
            # output block resident across k (index_map ignores k) = accumulator
            out_specs=pl.BlockSpec((tile_m, f_out_pad), lambda i, k: (i, 0)),
        ),
        compiler_params=pltpu.CompilerParams(
            # rows independent -> parallel (2-TC sharding on v7x); k is a reduction
            dimension_semantics=("parallel", "arbitrary"),
            vmem_limit_bytes=_vmem_limit_bytes(),
        ),
    )(adj_s, x, weight)

    return out[:n, :f_out]


# ---------------------------------------------------------------------------
# Demo / self-test
# ---------------------------------------------------------------------------
def xavier_uniform(key, fan_in, fan_out, dtype=jnp.float32):
    bound = math.sqrt(6.0 / (fan_in + fan_out))
    return jax.random.uniform(
        key, (fan_in, fan_out), dtype=dtype, minval=-bound, maxval=bound
    )


def _make_norm_adj(key, n):
    # Deterministic symmetric row-normalized adjacency (dense stand-in for the
    # sparse adj used by torch.sparse.mm).
    a = (jax.random.uniform(key, (n, n)) > 0.9).astype(jnp.float32)
    a = jnp.maximum(a, a.T) + jnp.eye(n, dtype=jnp.float32)
    return a / jnp.sum(a, axis=1, keepdims=True)


if __name__ == "__main__":
    key = jax.random.PRNGKey(0)

    # bf16-streamed adjacency vs pure-f32 reference: ~0.4% relative rounding on
    # the adjacency stream (f32 accumulation) -> compare with a matching tolerance.
    ATOL = RTOL = 2e-2

    # Case 1: aligned shapes (N=128, F_in=64, F_out=128)
    k_x, k_adj, k_w, key = *jax.random.split(key, 3), jax.random.split(key, 4)[3]
    N, F_IN, F_OUT = 128, 64, 128
    x = jax.random.normal(k_x, (N, F_IN), dtype=jnp.float32)
    adj = _make_norm_adj(k_adj, N)
    w = xavier_uniform(k_w, F_IN, F_OUT)

    out = jax.block_until_ready(graph_convolution(x, adj, w))
    ref = jnp.maximum(adj @ (x @ w), 0.0)
    assert out.shape == (N, F_OUT)
    assert jnp.allclose(out, ref, atol=ATOL, rtol=RTOL), "mismatch (aligned case)"

    # Case 2: non-aligned shapes exercise the padding path (N=200, F_out=96)
    k_x2, k_adj2, k_w2 = jax.random.split(key, 3)
    N2, F_IN2, F_OUT2 = 200, 48, 96
    x2 = jax.random.normal(k_x2, (N2, F_IN2), dtype=jnp.float32)
    adj2 = _make_norm_adj(k_adj2, N2)
    w2 = xavier_uniform(k_w2, F_IN2, F_OUT2)

    out2 = jax.block_until_ready(graph_convolution(x2, adj2, w2))
    ref2 = jnp.maximum(adj2 @ (x2 @ w2), 0.0)
    assert out2.shape == (N2, F_OUT2)
    assert jnp.allclose(out2, ref2, atol=ATOL, rtol=RTOL), "mismatch (padded case)"

    # TODO(synk): dropout (p=0.0 here) is an identity no-op; a training-mode
    # dropout would need pltpu.prng_seed / prng_random_bits in the kernel.
    print("KERNEL_OK")
</pallas_src>

<mosaic_0001>
module attributes {stable_mosaic.version = 11 : i64} {
  func.func @_gcn_fused_kernel(%arg0: i32, %arg1: i32, %arg2: memref<128x128xbf16, #tpu.memory_space<vmem>>, %arg3: memref<128x64xf32, #tpu.memory_space<vmem>>, %arg4: memref<64x128xf32, #tpu.memory_space<vmem>>, %arg5: memref<128x128xf32, #tpu.memory_space<vmem>>) attributes {dimension_semantics = [#tpu.dimension_semantics<parallel>, #tpu.dimension_semantics<arbitrary>], iteration_bounds = array<i64: 1, 1>, scalar_prefetch = 0 : i64, scratch_operands = 0 : i64, tpu.core_type = #tpu.core_type<tc>, window_params = [{transform_indices = @transform_0, window_bounds = array<i64: 128, 128>}, {transform_indices = @transform_1, window_bounds = array<i64: 128, 64>}, {pipeline_mode = #tpu.pipeline_mode<synchronous>, transform_indices = @transform_2, window_bounds = array<i64: 64, 128>}, {transform_indices = @transform_3, window_bounds = array<i64: 128, 128>}]} {
    %c0_i32 = arith.constant 0 : i32
    %0 = arith.cmpi eq, %arg1, %c0_i32 : i32
    %1 = arith.extui %0 : i1 to i32
    %c0_i32_0 = arith.constant 0 : i32
    %2 = arith.cmpi ne, %1, %c0_i32_0 : i32
    scf.if %2 {
      %cst_13 = arith.constant 0.000000e+00 : f32
      %15 = vector.broadcast %cst_13 : f32 to vector<128x128xf32>
      %c0_14 = arith.constant 0 : index
      %c0_15 = arith.constant 0 : index
      %16 = vector.load %arg5[%c0_14, %c0_15] : memref<128x128xf32, #tpu.memory_space<vmem>>, vector<128x128xf32>
      tpu.vector_store %arg5[%c0_14, %c0_15], %15 {strides = array<i32>} : memref<128x128xf32, #tpu.memory_space<vmem>>, vector<128x128xf32>,
    } else {
    }
    %c0 = arith.constant 0 : index
    %c0_1 = arith.constant 0 : index
    %3 = vector.load %arg3[%c0, %c0_1] : memref<128x64xf32, #tpu.memory_space<vmem>>, vector<128x64xf32>
    %c0_2 = arith.constant 0 : index
    %c0_3 = arith.constant 0 : index
    %4 = vector.load %arg4[%c0_2, %c0_3] : memref<64x128xf32, #tpu.memory_space<vmem>>, vector<64x128xf32>
    %cst = arith.constant dense<0.000000e+00> : vector<128x128xf32>
    %5 = tpu.matmul %3, %4, %cst {dimension_numbers = #tpu.dot_dimension_numbers<[1], [0], [0], [1], [0, 0, 1, 1], [], []>} : vector<128x64xf32>, vector<64x128xf32>, vector<128x128xf32> -> vector<128x128xf32>
    %c0_4 = arith.constant 0 : index
    %c0_5 = arith.constant 0 : index
    %6 = vector.load %arg5[%c0_4, %c0_5] : memref<128x128xf32, #tpu.memory_space<vmem>>, vector<128x128xf32>
    %c0_6 = arith.constant 0 : index
    %c0_7 = arith.constant 0 : index
    %7 = vector.load %arg2[%c0_6, %c0_7] : memref<128x128xbf16, #tpu.memory_space<vmem>>, vector<128x128xbf16>
    %8 = arith.truncf %5 : vector<128x128xf32> to vector<128x128xbf16>
    %cst_8 = arith.constant dense<0.000000e+00> : vector<128x128xf32>
    %9 = tpu.matmul %7, %8, %cst_8 {dimension_numbers = #tpu.dot_dimension_numbers<[1], [0], [0], [1], [0, 0, 1, 1], [], []>} : vector<128x128xbf16>, vector<128x128xbf16>, vector<128x128xf32> -> vector<128x128xf32>
    %10 = arith.addf %6, %9 : vector<128x128xf32>
    %c0_9 = arith.constant 0 : index
    %c0_10 = arith.constant 0 : index
    %11 = vector.load %arg5[%c0_9, %c0_10] : memref<128x128xf32, #tpu.memory_space<vmem>>, vector<128x128xf32>
    tpu.vector_store %arg5[%c0_9, %c0_10], %10 {strides = array<i32>} : memref<128x128xf32, #tpu.memory_space<vmem>>, vector<128x128xf32>,
    %c0_i32_11 = arith.constant 0 : i32
    %12 = arith.cmpi eq, %arg1, %c0_i32_11 : i32
    %13 = arith.extui %12 : i1 to i32
    %c0_i32_12 = arith.constant 0 : i32
    %14 = arith.cmpi ne, %13, %c0_i32_12 : i32
    scf.if %14 {
      %c0_13 = arith.constant 0 : index
      %c0_14 = arith.constant 0 : index
      %15 = vector.load %arg5[%c0_13, %c0_14] : memref<128x128xf32, #tpu.memory_space<vmem>>, vector<128x128xf32>
      %cst_15 = arith.constant 0.000000e+00 : f32
      %16 = vector.broadcast %cst_15 : f32 to vector<128x128xf32>
      %17 = arith.maximumf %15, %16 : vector<128x128xf32>
      %c0_16 = arith.constant 0 : index
      %c0_17 = arith.constant 0 : index
      %18 = vector.load %arg5[%c0_16, %c0_17] : memref<128x128xf32, #tpu.memory_space<vmem>>, vector<128x128xf32>
      tpu.vector_store %arg5[%c0_16, %c0_17], %17 {strides = array<i32>} : memref<128x128xf32, #tpu.memory_space<vmem>>, vector<128x128xf32>,
    } else {
    }
    return
  }
  func.func @transform_0(%arg0: i32, %arg1: i32) -> (i32, i32) {
    %c0_i32 = arith.constant 0 : i32
    return %arg0, %arg1 : i32, i32
  }
  func.func @transform_1(%arg0: i32, %arg1: i32) -> (i32, i32) {
    %c0_i32 = arith.constant 0 : i32
    %c0_i32_0 = arith.constant 0 : i32
    return %arg1, %c0_i32 : i32, i32
  }
  func.func @transform_2(%arg0: i32, %arg1: i32) -> (i32, i32) {
    %c0_i32 = arith.constant 0 : i32
    %c0_i32_0 = arith.constant 0 : i32
    %c0_i32_1 = arith.constant 0 : i32
    return %c0_i32, %c0_i32_0 : i32, i32
  }
  func.func @transform_3(%arg0: i32, %arg1: i32) -> (i32, i32) {
    %c0_i32 = arith.constant 0 : i32
    %c0_i32_0 = arith.constant 0 : i32
    return %arg0, %c0_i32 : i32, i32
  }
}

</mosaic_0001>

<llo_original>
// kernel: tpu_custom_call.1
$region0: #{tpu_custom_call.1}
  #allocation0 [shape = 'u32[]', space=smem, size = 0x4, offset = 0x4, fixed_abs, tag = 'smem constant byte address 0x4 - core index']
  #allocation1 [shape = 'u32[144,128]{1,0:T(1,128)}', space=vmem, size = 0x12000, scoped, tag = 'internal scratch']
  %s0 = inlined_call_operand.vmem [shape: bf16[128,128], index: 0, kind: input, shape index: {}]
  %s1 = inlined_call_operand.vmem [shape: f32[128,64], index: 1, kind: input, shape index: {}]
  %s2 = inlined_call_operand.vmem [shape: f32[64,128], index: 2, kind: input, shape index: {}]
  %s3 = inlined_call_operand.hbm [shape: f32[128,128], index: 3, kind: output, shape index: {}]
  %s4 = sld [smem:[#allocation0]]
  $region30: #{tpu_custom_call.1} parent=0
    _
  %s6 = ssub.s32 1, %s4
  %s7 = scalar_select 0, %s6, %s4
  $region1: #{tpu_custom_call.1} parent=0
    #allocation2 [shape = 'u8[65536]{0}', space=vmem, size = 0x10000, scoped, tag = 'output window, operand 0, single buffered']
    #allocation3 [shape = 's32[1]{0}', space=sflag, size = 0x4, scoped, tag = 'scoped memory for tpu_custom_call.1']
    %8 = vsyncpa [#allocation3], 0
    // Predicated region
    $region2: #{tpu_custom_call.1} parent=1 // pred_check
      _
    $region3: #{tpu_custom_call.1} parent=1 // pred_check_branch
      %10 = sbr.rel (0) target = $region5
    $region4: #{tpu_custom_call.1} parent=1 // pred_region
      _
    $region5: #{tpu_custom_call.1} parent=1 // pred_fallthru
      _
    // Predicated region
    $region6: #{tpu_custom_call.1} parent=1 // pred_check
      _
    $region7: #{tpu_custom_call.1} parent=1 // pred_check_branch
      %12 = sbr.rel (0) target = $region9
    $region8: #{tpu_custom_call.1} parent=1 // pred_region
      _
    $region9: #{tpu_custom_call.1} parent=1 // pred_fallthru
      _
    // Predicated region
    $region10: #{tpu_custom_call.1} parent=1 // pred_check
      _
    $region11: #{tpu_custom_call.1} parent=1 // pred_check_branch
      %14 = sbr.rel (0) target = $region13
    $region12: #{tpu_custom_call.1} parent=1 // pred_region
      _
    $region13: #{tpu_custom_call.1} parent=1 // pred_fallthru
      _
    %p16 = scmp.eq.s32.totalorder 0, 0
    // Predicated region
    $region14: #{tpu_custom_call.1} parent=1 // pred_check
      %p17 = pneg %p16
    $region15: #{tpu_custom_call.1} parent=1 // pred_check_branch
      %19 = sbr.rel (%p17) target = $region17
    $region16: #{tpu_custom_call.1} parent=1 // pred_region
      %20 = vst [vmem:[#allocation2] sm:$0xff] 0.0
      %21 = vst [vmem:[#allocation2 + $0x8] sm:$0xff] 0.0
      %22 = vst [vmem:[#allocation2 + $0x10] sm:$0xff] 0.0
      %23 = vst [vmem:[#allocation2 + $0x18] sm:$0xff] 0.0
      %24 = vst [vmem:[#allocation2 + $0x20] sm:$0xff] 0.0
      %25 = vst [vmem:[#allocation2 + $0x28] sm:$0xff] 0.0
      %26 = vst [vmem:[#allocation2 + $0x30] sm:$0xff] 0.0
      %27 = vst [vmem:[#allocation2 + $0x38] sm:$0xff] 0.0
      %28 = vst [vmem:[#allocation2 + $0x40] sm:$0xff] 0.0
      %29 = vst [vmem:[#allocation2 + $0x48] sm:$0xff] 0.0
      %30 = vst [vmem:[#allocation2 + $0x50] sm:$0xff] 0.0
      %31 = vst [vmem:[#allocation2 + $0x58] sm:$0xff] 0.0
      %32 = vst [vmem:[#allocation2 + $0x60] sm:$0xff] 0.0
      %33 = vst [vmem:[#allocation2 + $0x68] sm:$0xff] 0.0
      %34 = vst [vmem:[#allocation2 + $0x70] sm:$0xff] 0.0
      %35 = vst [vmem:[#allocation2 + $0x78] sm:$0xff] 0.0
    $region17: #{tpu_custom_call.1} parent=1 // pred_fallthru
      _
    %v36 = vld [vmem:[%s1] sm:$0xff]
    %v37 = vld [vmem:[%s1 + $0x8] sm:$0xff]
    %v38 = vld [vmem:[%s1 + $0x10] sm:$0xff]
    %v39 = vld [vmem:[%s1 + $0x18] sm:$0xff]
    %v40 = vld [vmem:[%s1 + $0x20] sm:$0xff]
    %v41 = vld [vmem:[%s1 + $0x28] sm:$0xff]
    %v42 = vld [vmem:[%s1 + $0x30] sm:$0xff]
    %v43 = vld [vmem:[%s1 + $0x38] sm:$0xff]
    %v44 = vld [vmem:[%s1 + $0x40] sm:$0xff]
    %v45 = vld [vmem:[%s1 + $0x48] sm:$0xff]
    %v46 = vld [vmem:[%s1 + $0x50] sm:$0xff]
    %v47 = vld [vmem:[%s1 + $0x58] sm:$0xff]
    %v48 = vld [vmem:[%s1 + $0x60] sm:$0xff]
    %v49 = vld [vmem:[%s1 + $0x68] sm:$0xff]
    %v50 = vld [vmem:[%s1 + $0x70] sm:$0xff]
    %v51 = vld [vmem:[%s1 + $0x78] sm:$0xff]
    %v52 = vld [vmem:[%s2] sm:$0xff]
    %v53 = vld [vmem:[%s2 + $0x8] sm:$0xff]
    %v54 = vld [vmem:[%s2 + $0x10] sm:$0xff]
    %v55 = vld [vmem:[%s2 + $0x18] sm:$0xff]
    %v56 = vld [vmem:[%s2 + $0x20] sm:$0xff]
    %v57 = vld [vmem:[%s2 + $0x28] sm:$0xff]
    %v58 = vld [vmem:[%s2 + $0x30] sm:$0xff]
    %v59 = vld [vmem:[%s2 + $0x38] sm:$0xff]
    %vm60 = vcmask 523264
    %v62 = vsel %vm60, %v36, 0
    %v65 = vsel %vm60, %v37, 0
    %v68 = vsel %vm60, %v38, 0
    %v71 = vsel %vm60, %v39, 0
    %v74 = vsel %vm60, %v40, 0
    %v77 = vsel %vm60, %v41, 0
    %v80 = vsel %vm60, %v42, 0
    %v83 = vsel %vm60, %v43, 0
    %v86 = vsel %vm60, %v44, 0
    %v89 = vsel %vm60, %v45, 0
    %v92 = vsel %vm60, %v46, 0
    %v95 = vsel %vm60, %v47, 0
    %v98 = vsel %vm60, %v48, 0
    %v101 = vsel %vm60, %v49, 0
    %v104 = vsel %vm60, %v50, 0
    %v107 = vsel %vm60, %v51, 0
    %109 = vmatprep.subr.mxu0 0.0
    %110 = vmatpush1.msra.mxu0 %v52
    %111 = vmatprep.subr.mxu0 0.0
    %112 = vmatpush1.msra.mxu0 %v53
    %113 = vmatprep.subr.mxu0 0.0
    %114 = vmatpush1.msra.mxu0 %v54
    %115 = vmatprep.subr.mxu0 0.0
    %116 = vmatpush1.msra.mxu0 %v55
    %117 = vmatprep.subr.mxu0 0.0
    %118 = vmatpush1.msra.mxu0 %v56
    %119 = vmatprep.subr.mxu0 0.0
    %120 = vmatpush1.msra.mxu0 %v57
    %121 = vmatprep.subr.mxu0 0.0
    %122 = vmatpush1.msra.mxu0 %v58
    %123 = vmatprep.subr.mxu0 0.0
    %124 = vmatpush1.msra.mxu0 %v59
    %125 = vmatprep.subr.mxu0 0.0
    %126 = vmatpush1.msra.mxu0 0.0
    %127 = vmatprep.subr.mxu0 0.0
    %128 = vmatpush1.msra.mxu0 0.0
    %129 = vmatprep.subr.mxu0 0.0
    %130 = vmatpush1.msra.mxu0 0.0
    %131 = vmatprep.subr.mxu0 0.0
    %132 = vmatpush1.msra.mxu0 0.0
    %133 = vmatprep.subr.mxu0 0.0
    %134 = vmatpush1.msra.mxu0 0.0
    %135 = vmatprep.subr.mxu0 0.0
    %136 = vmatpush1.msra.mxu0 0.0
    %137 = vmatprep.subr.mxu0 0.0
    %138 = vmatpush1.msra.mxu0 0.0
    %139 = vmatprep.subr.mxu0 0.0
    %140 = vmatpush1.msra.mxu0 0.0
    %141 = vmatprep.subr.mxu0 0.0
    %142 = vmatpush1.msra.mxu0 0.0
    %143 = vmatprep.subr.mxu0 0.0
    %144 = vmatpush1.msra.mxu0 0.0
    %145 = vmatprep.subr.mxu0 0.0
    %146 = vmatpush1.msra.mxu0 0.0
    %147 = vmatprep.subr.mxu0 0.0
    %148 = vmatpush1.msra.mxu0 0.0
    %149 = vmatprep.subr.mxu0 0.0
    %150 = vmatpush1.msra.mxu0 0.0
    %151 = vmatprep.subr.mxu0 0.0
    %152 = vmatpush1.msra.mxu0 0.0
    %153 = vmatprep.subr.mxu0 0.0
    %154 = vmatpush1.msra.mxu0 0.0
    %155 = vmatprep.subr.mxu0 0.0
    %156 = vmatpush1.msra.mxu0 0.0
    %157 = vmatprep.subr.mxu0 0.0
    %158 = vmatpush1.msra.mxu0 0.0
    %159 = vmatprep.subr.mxu0 0.0
    %160 = vmatpush1.msra.mxu0 0.0
    %161 = vmatprep.subr.mxu0 0.0
    %162 = vmatpush1.msra.mxu0 0.0
    %163 = vmatprep.subr.mxu0 0.0
    %164 = vmatpush1.msra.mxu0 0.0
    %165 = vmatprep.subr.mxu0 0.0
    %166 = vmatpush1.msra.mxu0 0.0
    %167 = vmatprep.subr.mxu0 0.0
    %168 = vmatpush1.msra.mxu0 0.0
    %169 = vmatprep.subr.mxu0 0.0
    %170 = vmatpush1.msra.mxu0 0.0
    %171 = vmatprep.subr.mxu0 0.0
    %172 = vmatpush1.msra.mxu0 0.0
    %173 = vmatprep.mubr.f32.mxu0 0.0
    %174 = vmatmul.mubr.f32.gmra.mrb[0].mxu0 %v62
    %v175 = vpop.f32.mrb[0].mxu0
    %v176 = vadd.f32 0.0, %v175
    %v177 = vpop.f32.mrb[0].mxu0
    %178 = vmatprep.mubr.f32.mxu0 0.0
    %179 = vmatmul.mubr.f32.gmra.mrb[0].mxu0 %v65
    %v180 = vpop.f32.mrb[0].mxu0
    %v181 = vadd.f32 0.0, %v180
    %v182 = vpop.f32.mrb[0].mxu0
    %183 = vmatprep.mubr.f32.mxu0 0.0
    %184 = vmatmul.mubr.f32.gmra.mrb[0].mxu0 %v68
    %v185 = vpop.f32.mrb[0].mxu0
    %v186 = vadd.f32 0.0, %v185
    %v187 = vpop.f32.mrb[0].mxu0
    %188 = vmatprep.mubr.f32.mxu0 0.0
    %189 = vmatmul.mubr.f32.gmra.mrb[0].mxu0 %v71
    %v190 = vpop.f32.mrb[0].mxu0
    %v191 = vadd.f32 0.0, %v190
    %v192 = vpop.f32.mrb[0].mxu0
    %193 = vmatprep.mubr.f32.mxu0 0.0
    %194 = vmatmul.mubr.f32.gmra.mrb[0].mxu0 %v74
    %v195 = vpop.f32.mrb[0].mxu0
    %v196 = vadd.f32 0.0, %v195
    %v197 = vpop.f32.mrb[0].mxu0
    %198 = vmatprep.mubr.f32.mxu0 0.0
    %199 = vmatmul.mubr.f32.gmra.mrb[0].mxu0 %v77
    %v200 = vpop.f32.mrb[0].mxu0
    %v201 = vadd.f32 0.0, %v200
    %v202 = vpop.f32.mrb[0].mxu0
    %203 = vmatprep.mubr.f32.mxu0 0.0
    %204 = vmatmul.mubr.f32.gmra.mrb[0].mxu0 %v80
    %v205 = vpop.f32.mrb[0].mxu0
    %v206 = vadd.f32 0.0, %v205
    %v207 = vpop.f32.mrb[0].mxu0
    %208 = vmatprep.mubr.f32.mxu0 0.0
    %209 = vmatmul.mubr.f32.gmra.mrb[0].mxu0 %v83
    %v210 = vpop.f32.mrb[0].mxu0
    %v211 = vadd.f32 0.0, %v210
    %v212 = vpop.f32.mrb[0].mxu0
    %213 = vmatprep.mubr.f32.mxu0 0.0
    %214 = vmatmul.mubr.f32.gmra.mrb[0].mxu0 %v86
    %v215 = vpop.f32.mrb[0].mxu0
    %v216 = vadd.f32 0.0, %v215
    %v217 = vpop.f32.mrb[0].mxu0
    %218 = vmatprep.mubr.f32.mxu0 0.0
    %219 = vmatmul.mubr.f32.gmra.mrb[0].mxu0 %v89
    %v220 = vpop.f32.mrb[0].mxu0
    %v221 = vadd.f32 0.0, %v220
    %v222 = vpop.f32.mrb[0].mxu0
    %223 = vmatprep.mubr.f32.mxu0 0.0
    %224 = vmatmul.mubr.f32.gmra.mrb[0].mxu0 %v92
    %v225 = vpop.f32.mrb[0].mxu0
    %v226 = vadd.f32 0.0, %v225
    %v227 = vpop.f32.mrb[0].mxu0
    %228 = vmatprep.mubr.f32.mxu0 0.0
    %229 = vmatmul.mubr.f32.gmra.mrb[0].mxu0 %v95
    %v230 = vpop.f32.mrb[0].mxu0
    %v231 = vadd.f32 0.0, %v230
    %v232 = vpop.f32.mrb[0].mxu0
    %233 = vmatprep.mubr.f32.mxu0 0.0
    %234 = vmatmul.mubr.f32.gmra.mrb[0].mxu0 %v98
    %v235 = vpop.f32.mrb[0].mxu0
    %v236 = vadd.f32 0.0, %v235
    %v237 = vpop.f32.mrb[0].mxu0
    %238 = vmatprep.mubr.f32.mxu0 0.0
    %239 = vmatmul.mubr.f32.gmra.mrb[0].mxu0 %v101
    %v240 = vpop.f32.mrb[0].mxu0
    %v241 = vadd.f32 0.0, %v240
    %v242 = vpop.f32.mrb[0].mxu0
    %243 = vmatprep.mubr.f32.mxu0 0.0
    %244 = vmatmul.mubr.f32.gmra.mrb[0].mxu0 %v104
    %v245 = vpop.f32.mrb[0].mxu0
    %v246 = vadd.f32 0.0, %v245
    %v247 = vpop.f32.mrb[0].mxu0
    %248 = vmatprep.mubr.f32.mxu0 0.0
    %249 = vmatmul.mubr.f32.gmra.mrb[0].mxu0 %v107
    %v250 = vpop.f32.mrb[0].mxu0
    %v251 = vadd.f32 0.0, %v250
    %v252 = vpop.f32.mrb[0].mxu0
    %253 = vdwg.mxu0
    %v254 = vld [vmem:[#allocation2] sm:$0xff]
    %v255 = vld [vmem:[#allocation2 + $0x8] sm:$0xff]
    %v256 = vld [vmem:[#allocation2 + $0x10] sm:$0xff]
    %v257 = vld [vmem:[#allocation2 + $0x18] sm:$0xff]
    %v258 = vld [vmem:[#allocation2 + $0x20] sm:$0xff]
    %v259 = vld [vmem:[#allocation2 + $0x28] sm:$0xff]
    %v260 = vld [vmem:[#allocation2 + $0x30] sm:$0xff]
    %v261 = vld [vmem:[#allocation2 + $0x38] sm:$0xff]
    %v262 = vld [vmem:[#allocation2 + $0x40] sm:$0xff]
    %v263 = vld [vmem:[#allocation2 + $0x48] sm:$0xff]
    %v264 = vld [vmem:[#allocation2 + $0x50] sm:$0xff]
    %v265 = vld [vmem:[#allocation2 + $0x58] sm:$0xff]
    %v266 = vld [vmem:[#allocation2 + $0x60] sm:$0xff]
    %v267 = vld [vmem:[#allocation2 + $0x68] sm:$0xff]
    %v268 = vld [vmem:[#allocation2 + $0x70] sm:$0xff]
    %v269 = vld [vmem:[#allocation2 + $0x78] sm:$0xff]
    %v270 = vld [vmem:[%s0] sm:$0xf]
    %v271 = vld [vmem:[%s0 + $0x4] sm:$0xf]
    %v272 = vld [vmem:[%s0 + $0x8] sm:$0xf]
    %v273 = vld [vmem:[%s0 + $0xc] sm:$0xf]
    %v274 = vld [vmem:[%s0 + $0x10] sm:$0xf]
    %v275 = vld [vmem:[%s0 + $0x14] sm:$0xf]
    %v276 = vld [vmem:[%s0 + $0x18] sm:$0xf]
    %v277 = vld [vmem:[%s0 + $0x1c] sm:$0xf]
    %v278 = vld [vmem:[%s0 + $0x20] sm:$0xf]
    %v279 = vld [vmem:[%s0 + $0x24] sm:$0xf]
    %v280 = vld [vmem:[%s0 + $0x28] sm:$0xf]
    %v281 = vld [vmem:[%s0 + $0x2c] sm:$0xf]
    %v282 = vld [vmem:[%s0 + $0x30] sm:$0xf]
    %v283 = vld [vmem:[%s0 + $0x34] sm:$0xf]
    %v284 = vld [vmem:[%s0 + $0x38] sm:$0xf]
    %v285 = vld [vmem:[%s0 + $0x3c] sm:$0xf]
    %v286 = vpack.c.bf16 %v181, %v176
    %v287 = vpack.c.bf16 %v191, %v186
    %v288 = vpack.c.bf16 %v201, %v196
    %v289 = vpack.c.bf16 %v211, %v206
    %v290 = vpack.c.bf16 %v221, %v216
    %v291 = vpack.c.bf16 %v231, %v226
    %v292 = vpack.c.bf16 %v241, %v236
    %v293 = vpack.c.bf16 %v251, %v246
    %v310 = vunpack.c.l.b16 %v270
    %v311 = vunpack.c.l.b16 %v271
    %v312 = vunpack.c.l.b16 %v272
    %v313 = vunpack.c.l.b16 %v273
    %v314 = vunpack.c.l.b16 %v274
    %v315 = vunpack.c.l.b16 %v275
    %v316 = vunpack.c.l.b16 %v276
    %v317 = vunpack.c.l.b16 %v277
    %v318 = vunpack.c.l.b16 %v278
    %v319 = vunpack.c.l.b16 %v279
    %v320 = vunpack.c.l.b16 %v280
    %v321 = vunpack.c.l.b16 %v281
    %v322 = vunpack.c.l.b16 %v282
    %v323 = vunpack.c.l.b16 %v283
    %v324 = vunpack.c.l.b16 %v284
    %v325 = vunpack.c.l.b16 %v285
    %v326 = vpack.c.b16 %v311, %v310
    %v327 = vpack.c.b16 %v313, %v312
    %v328 = vpack.c.b16 %v315, %v314
    %v329 = vpack.c.b16 %v317, %v316
    %v330 = vpack.c.b16 %v319, %v318
    %v331 = vpack.c.b16 %v321, %v320
    %v332 = vpack.c.b16 %v323, %v322
    %v333 = vpack.c.b16 %v325, %v324
    %342 = vmatprep.subr.bf16.mxu0 0
    %343 = vmatpush1.bf16.msra.mxu0 %v286
    %344 = vmatprep.subr.bf16.mxu0 0
    %345 = vmatpush1.bf16.msra.mxu0 %v287
    %346 = vmatprep.subr.bf16.mxu0 0
    %347 = vmatpush1.bf16.msra.mxu0 %v288
    %348 = vmatprep.subr.bf16.mxu0 0
    %349 = vmatpush1.bf16.msra.mxu0 %v289
    %350 = vmatprep.subr.bf16.mxu0 0
    %351 = vmatpush1.bf16.msra.mxu0 %v290
    %352 = vmatprep.subr.bf16.mxu0 0
    %353 = vmatpush1.bf16.msra.mxu0 %v291
    %354 = vmatprep.subr.bf16.mxu0 0
    %355 = vmatpush1.bf16.msra.mxu0 %v292
    %356 = vmatprep.subr.bf16.mxu0 0
    %357 = vmatpush1.bf16.msra.mxu0 %v293
    %358 = vmatprep.subr.bf16.mxu0 0
    %359 = vmatpush1.bf16.msra.mxu0 0
    %360 = vmatprep.subr.bf16.mxu0 0
    %361 = vmatpush1.bf16.msra.mxu0 0
    %362 = vmatprep.subr.bf16.mxu0 0
    %363 = vmatpush1.bf16.msra.mxu0 0
    %364 = vmatprep.subr.bf16.mxu0 0
    %365 = vmatpush1.bf16.msra.mxu0 0
    %366 = vmatprep.subr.bf16.mxu0 0
    %367 = vmatpush1.bf16.msra.mxu0 0
    %368 = vmatprep.subr.bf16.mxu0 0
    %369 = vmatpush1.bf16.msra.mxu0 0
    %370 = vmatprep.subr.bf16.mxu0 0
    %371 = vmatpush1.bf16.msra.mxu0 0
    %372 = vmatprep.subr.bf16.mxu0 0
    %373 = vmatpush1.bf16.msra.mxu0 0
    %374 = vmatprep.mubr.bf16.mxu0 0
    %375 = vmatmul.mubr.bf16.gmra.mrb[0].mxu0 %v326
    %v376 = vpop.f32.mrb[0].mxu0
    %v377 = vadd.f32 0.0, %v376
    %v378 = vpop.f32.mrb[0].mxu0
    %v379 = vpop.f32.mrb[0].mxu0
    %v380 = vadd.f32 0.0, %v379
    %v381 = vpop.f32.mrb[0].mxu0
    %382 = vmatprep.mubr.bf16.mxu0 0
    %383 = vmatmul.mubr.bf16.gmra.mrb[0].mxu0 %v327
    %v384 = vpop.f32.mrb[0].mxu0
    %v385 = vadd.f32 0.0, %v384
    %v386 = vpop.f32.mrb[0].mxu0
    %v387 = vpop.f32.mrb[0].mxu0
    %v388 = vadd.f32 0.0, %v387
    %v389 = vpop.f32.mrb[0].mxu0
    %390 = vmatprep.mubr.bf16.mxu0 0
    %391 = vmatmul.mubr.bf16.gmra.mrb[0].mxu0 %v328
    %v392 = vpop.f32.mrb[0].mxu0
    %v393 = vadd.f32 0.0, %v392
    %v394 = vpop.f32.mrb[0].mxu0
    %v395 = vpop.f32.mrb[0].mxu0
    %v396 = vadd.f32 0.0, %v395
    %v397 = vpop.f32.mrb[0].mxu0
    %398 = vmatprep.mubr.bf16.mxu0 0
    %399 = vmatmul.mubr.bf16.gmra.mrb[0].mxu0 %v329
    %v400 = vpop.f32.mrb[0].mxu0
    %v401 = vadd.f32 0.0, %v400
    %v402 = vpop.f32.mrb[0].mxu0
    %v403 = vpop.f32.mrb[0].mxu0
    %v404 = vadd.f32 0.0, %v403
    %v405 = vpop.f32.mrb[0].mxu0
    %406 = vmatprep.mubr.bf16.mxu0 0
    %407 = vmatmul.mubr.bf16.gmra.mrb[0].mxu0 %v330
    %v408 = vpop.f32.mrb[0].mxu0
    %v409 = vadd.f32 0.0, %v408
    %v410 = vpop.f32.mrb[0].mxu0
    %v411 = vpop.f32.mrb[0].mxu0
    %v412 = vadd.f32 0.0, %v411
    %v413 = vpop.f32.mrb[0].mxu0
    %414 = vmatprep.mubr.bf16.mxu0 0
    %415 = vmatmul.mubr.bf16.gmra.mrb[0].mxu0 %v331
    %v416 = vpop.f32.mrb[0].mxu0
    %v417 = vadd.f32 0.0, %v416
    %v418 = vpop.f32.mrb[0].mxu0
    %v419 = vpop.f32.mrb[0].mxu0
    %v420 = vadd.f32 0.0, %v419
    %v421 = vpop.f32.mrb[0].mxu0
    %422 = vmatprep.mubr.bf16.mxu0 0
    %423 = vmatmul.mubr.bf16.gmra.mrb[0].mxu0 %v332
    %v424 = vpop.f32.mrb[0].mxu0
    %v425 = vadd.f32 0.0, %v424
    %v426 = vpop.f32.mrb[0].mxu0
    %v427 = vpop.f32.mrb[0].mxu0
    %v428 = vadd.f32 0.0, %v427
    %v429 = vpop.f32.mrb[0].mxu0
    %430 = vmatprep.mubr.bf16.mxu0 0
    %431 = vmatmul.mubr.bf16.gmra.mrb[0].mxu0 %v333
    %v432 = vpop.f32.mrb[0].mxu0
    %v433 = vadd.f32 0.0, %v432
    %v434 = vpop.f32.mrb[0].mxu0
    %v435 = vpop.f32.mrb[0].mxu0
    %v436 = vadd.f32 0.0, %v435
    %v437 = vpop.f32.mrb[0].mxu0
    %438 = vdwg.mxu0
    %v439 = vadd.f32 %v254, %v377
    %v440 = vadd.f32 %v255, %v380
    %v441 = vadd.f32 %v256, %v385
    %v442 = vadd.f32 %v257, %v388
    %v443 = vadd.f32 %v258, %v393
    %v444 = vadd.f32 %v259, %v396
    %v445 = vadd.f32 %v260, %v401
    %v446 = vadd.f32 %v261, %v404
    %v447 = vadd.f32 %v262, %v409
    %v448 = vadd.f32 %v263, %v412
    %v449 = vadd.f32 %v264, %v417
    %v450 = vadd.f32 %v265, %v420
    %v451 = vadd.f32 %v266, %v425
    %v452 = vadd.f32 %v267, %v428
    %v453 = vadd.f32 %v268, %v433
    %v454 = vadd.f32 %v269, %v436
    %455 = vst [vmem:[#allocation2] sm:$0xff] %v439
    %456 = vst [vmem:[#allocation2 + $0x8] sm:$0xff] %v440
    %457 = vst [vmem:[#allocation2 + $0x10] sm:$0xff] %v441
    %458 = vst [vmem:[#allocation2 + $0x18] sm:$0xff] %v442
    %459 = vst [vmem:[#allocation2 + $0x20] sm:$0xff] %v443
    %460 = vst [vmem:[#allocation2 + $0x28] sm:$0xff] %v444
    %461 = vst [vmem:[#allocation2 + $0x30] sm:$0xff] %v445
    %462 = vst [vmem:[#allocation2 + $0x38] sm:$0xff] %v446
    %463 = vst [vmem:[#allocation2 + $0x40] sm:$0xff] %v447
    %464 = vst [vmem:[#allocation2 + $0x48] sm:$0xff] %v448
    %465 = vst [vmem:[#allocation2 + $0x50] sm:$0xff] %v449
    %466 = vst [vmem:[#allocation2 + $0x58] sm:$0xff] %v450
    %467 = vst [vmem:[#allocation2 + $0x60] sm:$0xff] %v451
    %468 = vst [vmem:[#allocation2 + $0x68] sm:$0xff] %v452
    %469 = vst [vmem:[#allocation2 + $0x70] sm:$0xff] %v453
    %470 = vst [vmem:[#allocation2 + $0x78] sm:$0xff] %v454
    // Predicated region
    $region18: #{tpu_custom_call.1} parent=1 // pred_check
      %p471 = pneg %p16
    $region19: #{tpu_custom_call.1} parent=1 // pred_check_branch
      %473 = sbr.rel (%p471) target = $region21
    $region20: #{tpu_custom_call.1} parent=1 // pred_region
      %v474 = vld [vmem:[#allocation2] sm:$0xff]
      %v475 = vld [vmem:[#allocation2 + $0x8] sm:$0xff]
      %v476 = vld [vmem:[#allocation2 + $0x10] sm:$0xff]
      %v477 = vld [vmem:[#allocation2 + $0x18] sm:$0xff]
      %v478 = vld [vmem:[#allocation2 + $0x20] sm:$0xff]
      %v479 = vld [vmem:[#allocation2 + $0x28] sm:$0xff]
      %v480 = vld [vmem:[#allocation2 + $0x30] sm:$0xff]
      %v481 = vld [vmem:[#allocation2 + $0x38] sm:$0xff]
      %v482 = vld [vmem:[#allocation2 + $0x40] sm:$0xff]
      %v483 = vld [vmem:[#allocation2 + $0x48] sm:$0xff]
      %v484 = vld [vmem:[#allocation2 + $0x50] sm:$0xff]
      %v485 = vld [vmem:[#allocation2 + $0x58] sm:$0xff]
      %v486 = vld [vmem:[#allocation2 + $0x60] sm:$0xff]
      %v487 = vld [vmem:[#allocation2 + $0x68] sm:$0xff]
      %v488 = vld [vmem:[#allocation2 + $0x70] sm:$0xff]
      %v489 = vld [vmem:[#allocation2 + $0x78] sm:$0xff]
      %v490 = vmax.f32 %v474, 0.0
      %v491 = vmax.f32 %v475, 0.0
      %v492 = vmax.f32 %v476, 0.0
      %v493 = vmax.f32 %v477, 0.0
      %v494 = vmax.f32 %v478, 0.0
      %v495 = vmax.f32 %v479, 0.0
      %v496 = vmax.f32 %v480, 0.0
      %v497 = vmax.f32 %v481, 0.0
      %v498 = vmax.f32 %v482, 0.0
      %v499 = vmax.f32 %v483, 0.0
      %v500 = vmax.f32 %v484, 0.0
      %v501 = vmax.f32 %v485, 0.0
      %v502 = vmax.f32 %v486, 0.0
      %v503 = vmax.f32 %v487, 0.0
      %v504 = vmax.f32 %v488, 0.0
      %v505 = vmax.f32 %v489, 0.0
      %506 = vst [vmem:[#allocation2] sm:$0xff] %v490
      %507 = vst [vmem:[#allocation2 + $0x8] sm:$0xff] %v491
      %508 = vst [vmem:[#allocation2 + $0x10] sm:$0xff] %v492
      %509 = vst [vmem:[#allocation2 + $0x18] sm:$0xff] %v493
      %510 = vst [vmem:[#allocation2 + $0x20] sm:$0xff] %v494
      %511 = vst [vmem:[#allocation2 + $0x28] sm:$0xff] %v495
      %512 = vst [vmem:[#allocation2 + $0x30] sm:$0xff] %v496
      %513 = vst [vmem:[#allocation2 + $0x38] sm:$0xff] %v497
      %514 = vst [vmem:[#allocation2 + $0x40] sm:$0xff] %v498
      %515 = vst [vmem:[#allocation2 + $0x48] sm:$0xff] %v499
      %516 = vst [vmem:[#allocation2 + $0x50] sm:$0xff] %v500
      %517 = vst [vmem:[#allocation2 + $0x58] sm:$0xff] %v501
      %518 = vst [vmem:[#allocation2 + $0x60] sm:$0xff] %v502
      %519 = vst [vmem:[#allocation2 + $0x68] sm:$0xff] %v503
      %520 = vst [vmem:[#allocation2 + $0x70] sm:$0xff] %v504
      %521 = vst [vmem:[#allocation2 + $0x78] sm:$0xff] %v505
    $region21: #{tpu_custom_call.1} parent=1 // pred_fallthru
      _
    // Predicated region
    $region22: #{tpu_custom_call.1} parent=1 // pred_check
      _
    $region23: #{tpu_custom_call.1} parent=1 // pred_check_branch
      %523 = sbr.rel (0) target = $region25
    $region24: #{tpu_custom_call.1} parent=1 // pred_region
      %s525 = ssub.s32 2048, 2048
      %526 = vsyncadd [#allocation3], %s525
      %s527 = sshll.u32 [#allocation2], 4
      %s528 = int_to_ptr.vmem [resolvable:$true] %s527
      %533 = dma.vmem_to_hbm [thread:$0]  %s528, 2048, %s3, [#allocation3], 128, 128, 8
    $region25: #{tpu_custom_call.1} parent=1 // pred_fallthru
      _
    // Predicated region
    $region26: #{tpu_custom_call.1} parent=1 // pred_check
      _
    $region27: #{tpu_custom_call.1} parent=1 // pred_check_branch
      %535 = sbr.rel (0) target = $region29
    $region28: #{tpu_custom_call.1} parent=1 // pred_region
      %536 = dma.done [#allocation3], 2048
    $region29: #{tpu_custom_call.1} parent=1 // pred_fallthru
      _
    %537 = vsyncpa [#allocation3], 1

</llo_original>
